<compile_context>
chip_gen: v7x
topology: tpu7x:2x2x1
jax: 0.10.0
libtpu: 0.0.40
codegen_flags: <defaults>
</compile_context>

<pallas_src>
import functools

import jax
import jax.numpy as jnp
from jax.experimental import pallas as pl
from jax.experimental.pallas import tpu as pltpu

_LANES = 128


def _pow_term(x, p):
    """x**p, specialized so small integer p stays on the VPU (no EUP exp/log)."""
    ip = None
    try:
        if float(p) == int(p) and int(p) >= 1:
            ip = int(p)
    except (TypeError, ValueError):
        ip = None
    if ip is not None and ip <= 8:
        y = x
        for _ in range(ip - 1):
            y = y * x
        return y
    # TODO(synk): genuinely fractional p lowers to exp/log on the single EUP
    # port and will cap throughput below the HBM roofline.
    return x ** p


def _dice_tiled_kernel(p_ref, t_ref, num_ref, den_ref, *, p, rows_block,
                       chunk_rows, k_tiles, total_rows, needs_mask, last_tile):
    """Grid = (batch, row_split, row_tile); reduces row tiles per (batch, split).

    num_ref/den_ref are (1, 1, 8, 128) lane-partial accumulators that live in
    the revisited output blocks across the innermost ("arbitrary") axis.
    """
    k = pl.program_id(2)

    @pl.when(k == 0)
    def _init():
        num_ref[...] = jnp.zeros_like(num_ref)
        den_ref[...] = jnp.zeros_like(den_ref)

    if rows_block % 8 != 0:
        # Tiny single full-extent tile (r < 8 or not 8-aligned); never ragged.
        pred = p_ref[0].astype(jnp.float32)          # (rows_block, 128)
        tgt = t_ref[0].astype(jnp.float32)
        prod = pred * tgt
        pw = _pow_term(pred, p) + _pow_term(tgt, p)
        num_ref[0, 0, 0:1, :] += jnp.sum(prod, axis=0, keepdims=True)
        den_ref[0, 0, 0:1, :] += jnp.sum(pw, axis=0, keepdims=True)
        return

    n_chunks = rows_block // chunk_rows
    g = pl.program_id(1) * k_tiles + k                # global row-tile index

    def accumulate(masked):
        def chunk_body(c, carry):
            num_acc, den_acc = carry
            start = pl.multiple_of(c * chunk_rows, chunk_rows)
            pr = p_ref[0, pl.ds(start, chunk_rows), :].astype(jnp.float32)
            tg = t_ref[0, pl.ds(start, chunk_rows), :].astype(jnp.float32)
            if masked:
                # Mask inputs BEFORE any multiply so OOB garbage never leaks.
                rows = jax.lax.broadcasted_iota(
                    jnp.int32, (chunk_rows, _LANES), 0)
                valid = (rows + g * rows_block + start) < total_rows
                pr = jnp.where(valid, pr, 0.0)
                tg = jnp.where(valid, tg, 0.0)
            prod = pr * tg
            pw = _pow_term(pr, p) + _pow_term(tg, p)
            # (G,8,128) leading-axis sum = pure VPU adds (no XLU in steady state).
            num_acc = num_acc + jnp.sum(prod.reshape(-1, 8, _LANES), axis=0)
            den_acc = den_acc + jnp.sum(pw.reshape(-1, 8, _LANES), axis=0)
            return num_acc, den_acc

        zero = jnp.zeros((8, _LANES), jnp.float32)
        num_part, den_part = jax.lax.fori_loop(
            0, n_chunks, chunk_body, (zero, zero))
        num_ref[0, 0] += num_part
        den_ref[0, 0] += den_part

    if needs_mask:
        # Pay the iota/compare/select only on the single ragged row-tile.
        @pl.when(g != last_tile)
        def _bulk():
            accumulate(masked=False)

        @pl.when(g == last_tile)
        def _ragged():
            accumulate(masked=True)
    else:
        accumulate(masked=False)


def _dice_batched_kernel(p_ref, t_ref, num_ref, den_ref, *, p):
    """Batch-tiled variant for small per-item row counts: block = (bt, r, 128)."""
    pred = p_ref[...].astype(jnp.float32)             # (bt, r, 128)
    tgt = t_ref[...].astype(jnp.float32)
    prod = pred * tgt
    pw = _pow_term(pred, p) + _pow_term(tgt, p)
    num_ref[...] = jnp.sum(prod, axis=1)              # (bt, 128) lane partials
    den_ref[...] = jnp.sum(pw, axis=1)


def binary_dice_loss(predict, target, *, smooth=0.0001, p=2, reduction="mean",
                     block_bytes=1 << 20, chunk_rows=512,
                     vmem_limit_bytes=None):
    """Binary Dice loss computed with Pallas TPU kernels.

    block_bytes: target bytes (in the input dtype) per input per grid step.
      The 1 MiB default sits at ~85% of the HBM roofline and stays under
      v5e's 16 MiB scoped-VMEM default.  On v6e raise it to 2-8 MiB with
      vmem_limit_bytes ~ 64<<20; on v7x raise it similarly but keep
      2 inputs x 2 pipeline buffers x block_bytes (+ ~4 x chunk of f32
      temporaries) comfortably under the 64 MiB/TC physical VMEM
      (vmem_limit_bytes ~ 48<<20).
    chunk_rows: rows of 128 lanes consumed per inner fori_loop step; bounds
      in-kernel f32 temporaries independently of block_bytes.
    """
    assert predict.shape[0] == target.shape[0], (
        "predict & target batch size don't match")
    n = predict.shape[0]
    lanes = _LANES

    # Same flattening as torch .view(N, -1); dtype preserved through the DMA.
    pred2d = predict.reshape(n, -1)
    tgt2d = target.reshape(n, -1)
    l = pred2d.shape[1]

    if l % lanes != 0:
        # TODO(synk): mask the lane tail in-kernel instead of this host-side
        # pad (the pad costs one extra HBM pass over both inputs whenever the
        # flattened length is not 128-aligned).
        assert float(p) > 0, "zero padding requires p > 0"
        pad = lanes - (l % lanes)
        pred2d = jnp.pad(pred2d, ((0, 0), (0, pad)))
        tgt2d = jnp.pad(tgt2d, ((0, 0), (0, pad)))
        l += pad

    r = l // lanes
    pred3d = pred2d.reshape(n, r, lanes)   # row-major: zero-cost reshape
    tgt3d = tgt2d.reshape(n, r, lanes)

    p_item = jnp.dtype(pred3d.dtype).itemsize
    t_item = jnp.dtype(tgt3d.dtype).itemsize
    max_itemsize = max(p_item, t_item)
    min_itemsize = min(p_item, t_item)
    pack = max(8, 32 // min_itemsize)       # sublane packing: 8/16/32 rows

    per_item_bytes = r * lanes * max_itemsize
    use_batched = (n >= 8) and (per_item_bytes * 8 <= block_bytes)

    cparams = pltpu.CompilerParams
    if use_batched:
        # ---- Path B: many batch items per step (small per-item row count). ----
        bt = max(1, block_bytes // max(1, per_item_bytes))
        bt = max(8, (bt // 8) * 8)
        bt = min(bt, (n // 8) * 8)
        kernel = functools.partial(_dice_batched_kernel, p=p)
        num_par, den_par = pl.pallas_call(
            kernel,
            out_shape=(jax.ShapeDtypeStruct((n, lanes), jnp.float32),
                       jax.ShapeDtypeStruct((n, lanes), jnp.float32)),
            grid_spec=pltpu.PrefetchScalarGridSpec(
                num_scalar_prefetch=0,
                grid=(pl.cdiv(n, bt),),
                in_specs=[
                    pl.BlockSpec((bt, r, lanes), lambda i: (i, 0, 0)),
                    pl.BlockSpec((bt, r, lanes), lambda i: (i, 0, 0)),
                ],
                out_specs=[
                    pl.BlockSpec((bt, lanes), lambda i: (i, 0)),
                    pl.BlockSpec((bt, lanes), lambda i: (i, 0)),
                ]),
            compiler_params=cparams(
                dimension_semantics=("parallel",),
                vmem_limit_bytes=vmem_limit_bytes),
        )(pred3d, tgt3d)
    else:
        # ---- Path A: per-item blocks, row-tile reduction on the inner axis. ----
        rows_target = max(pack,
                          (block_bytes // (lanes * max_itemsize) // pack) * pack)
        rows_block = r if r <= rows_target else rows_target
        kt_total = pl.cdiv(r, rows_block)
        needs_mask = (kt_total * rows_block) != r
        if needs_mask:
            assert float(p) > 0, "ragged-tail masking with zeros requires p > 0"

        # Split the row axis across a second "parallel" axis when the batch
        # alone can't feed both v7x TensorCores.
        n_splits = 2 if (n == 1 and kt_total >= 2 and kt_total % 2 == 0) else 1
        k_tiles = kt_total // n_splits

        eff_chunk = rows_block
        if (rows_block % 8 == 0 and chunk_rows >= 8 and chunk_rows % 8 == 0
                and rows_block % chunk_rows == 0 and chunk_rows < rows_block):
            eff_chunk = chunk_rows

        kernel = functools.partial(
            _dice_tiled_kernel, p=p, rows_block=rows_block,
            chunk_rows=eff_chunk, k_tiles=k_tiles, total_rows=r,
            needs_mask=needs_mask, last_tile=kt_total - 1)

        num_par, den_par = pl.pallas_call(
            kernel,
            out_shape=(
                jax.ShapeDtypeStruct((n, n_splits, 8, lanes), jnp.float32),
                jax.ShapeDtypeStruct((n, n_splits, 8, lanes), jnp.float32)),
            grid_spec=pltpu.PrefetchScalarGridSpec(
                num_scalar_prefetch=0,
                grid=(n, n_splits, k_tiles),
                in_specs=[
                    pl.BlockSpec((1, rows_block, lanes),
                                 lambda b, s, k: (b, s * k_tiles + k, 0)),
                    pl.BlockSpec((1, rows_block, lanes),
                                 lambda b, s, k: (b, s * k_tiles + k, 0)),
                ],
                out_specs=[
                    pl.BlockSpec((1, 1, 8, lanes), lambda b, s, k: (b, s, 0, 0)),
                    pl.BlockSpec((1, 1, 8, lanes), lambda b, s, k: (b, s, 0, 0)),
                ]),
            compiler_params=cparams(
                dimension_semantics=("parallel", "parallel", "arbitrary"),
                vmem_limit_bytes=vmem_limit_bytes),
        )(pred3d, tgt3d)

    # Tiny wrapper-side finalize: combine lane/split partials, 1 - num/den.
    reduce_axes = tuple(range(1, num_par.ndim))
    num = 2.0 * jnp.sum(num_par, axis=reduce_axes) + smooth
    den = jnp.sum(den_par, axis=reduce_axes) + smooth
    per_batch = 1.0 - num / den

    if reduction == "mean":
        return jnp.mean(per_batch)
    if reduction == "sum":
        return jnp.sum(per_batch)
    if reduction == "none":
        return per_batch
    raise Exception("Unexpected reduction {}".format(reduction))


def _reference_dice_loss(predict, target, smooth=0.0001, p=2, reduction="mean"):
    n = predict.shape[0]
    pr = predict.reshape(n, -1).astype(jnp.float32)
    tg = target.reshape(n, -1).astype(jnp.float32)
    num = 2.0 * jnp.sum(pr * tg, axis=1) + smooth
    den = jnp.sum(pr ** p + tg ** p, axis=1) + smooth
    loss = 1.0 - num / den
    if reduction == "mean":
        return jnp.mean(loss)
    if reduction == "sum":
        return jnp.sum(loss)
    return loss


if __name__ == "__main__":
    key = jax.random.PRNGKey(0)
    k1, k2, k3, k4 = jax.random.split(key, 4)

    # Primary case (typical NCHW segmentation logits): batch=2, C=4, 16x16.
    predict = jax.nn.sigmoid(
        jax.random.normal(k1, (2, 4, 16, 16), dtype=jnp.float32))
    target = (jax.random.uniform(k2, (2, 4, 16, 16)) > 0.5).astype(jnp.float32)
    loss = jax.block_until_ready(binary_dice_loss(predict, target))
    ref = _reference_dice_loss(predict, target)
    assert jnp.allclose(loss, ref, rtol=1e-5, atol=1e-6), (loss, ref)

    # Ragged last row-tile + multi-chunk inner loop (mask only on final tile).
    p2 = jax.nn.sigmoid(jax.random.normal(k3, (2, 3, 40, 64), jnp.float32))
    t2 = (jax.random.uniform(k4, (2, 3, 40, 64)) > 0.5).astype(jnp.float32)
    loss2 = jax.block_until_ready(
        binary_dice_loss(p2, t2, block_bytes=16 * 128 * 4, chunk_rows=8))
    ref2 = _reference_dice_loss(p2, t2)
    assert jnp.allclose(loss2, ref2, rtol=1e-5, atol=1e-6), (loss2, ref2)

    # bf16 inputs stay bf16 through the DMA and widen in-register.
    loss3 = jax.block_until_ready(binary_dice_loss(
        predict.astype(jnp.bfloat16), target.astype(jnp.bfloat16)))
    ref3 = _reference_dice_loss(
        predict.astype(jnp.bfloat16), target.astype(jnp.bfloat16))
    assert jnp.allclose(loss3, ref3, rtol=1e-4, atol=1e-5), (loss3, ref3)

    # Batch-tiled path (larger N, small per-item row count), reduction='none'.
    p4 = jax.nn.sigmoid(jax.random.normal(k1, (16, 4, 16, 16), jnp.float32))
    t4 = (jax.random.uniform(k2, (16, 4, 16, 16)) > 0.5).astype(jnp.float32)
    loss4 = jax.block_until_ready(binary_dice_loss(p4, t4, reduction="none"))
    ref4 = _reference_dice_loss(p4, t4, reduction="none")
    assert jnp.allclose(loss4, ref4, rtol=1e-5, atol=1e-6), (loss4, ref4)

    # N == 1: row axis split across a second 'parallel' grid axis (v7x 2-TC).
    p5 = jax.nn.sigmoid(jax.random.normal(k3, (1, 8, 32, 128), jnp.float32))
    t5 = (jax.random.uniform(k4, (1, 8, 32, 128)) > 0.5).astype(jnp.float32)
    loss5 = jax.block_until_ready(
        binary_dice_loss(p5, t5, block_bytes=64 * 128 * 4, chunk_rows=16))
    ref5 = _reference_dice_loss(p5, t5)
    assert jnp.allclose(loss5, ref5, rtol=1e-5, atol=1e-6), (loss5, ref5)

    print("KERNEL_OK")
</pallas_src>

<mosaic_0001>
module attributes {stable_mosaic.version = 11 : i64} {
  func.func @_dice_tiled_kernel(%arg0: i32, %arg1: i32, %arg2: i32, %arg3: memref<1x8x128xf32, #tpu.memory_space<vmem>>, %arg4: memref<1x8x128xf32, #tpu.memory_space<vmem>>, %arg5: memref<1x1x8x128xf32, #tpu.memory_space<vmem>>, %arg6: memref<1x1x8x128xf32, #tpu.memory_space<vmem>>) attributes {dimension_semantics = [#tpu.dimension_semantics<parallel>, #tpu.dimension_semantics<parallel>, #tpu.dimension_semantics<arbitrary>], iteration_bounds = array<i64: 2, 1, 1>, scalar_prefetch = 0 : i64, scratch_operands = 0 : i64, tpu.core_type = #tpu.core_type<tc>, window_params = [{transform_indices = @transform_0, window_bounds = array<i64: 1, 8, 128>}, {transform_indices = @transform_1, window_bounds = array<i64: 1, 8, 128>}, {transform_indices = @transform_2, window_bounds = array<i64: 1, 1, 8, 128>}, {transform_indices = @transform_3, window_bounds = array<i64: 1, 1, 8, 128>}]} {
    %c0_i32 = arith.constant 0 : i32
    %0 = arith.cmpi eq, %arg2, %c0_i32 : i32
    %1 = arith.extui %0 : i1 to i32
    %c0_i32_0 = arith.constant 0 : i32
    %2 = arith.cmpi ne, %1, %c0_i32_0 : i32
    scf.if %2 {
      %cst_23 = arith.constant 0.000000e+00 : f32
      %34 = vector.broadcast %cst_23 : f32 to vector<1x1x8x128xf32>
      %c0_24 = arith.constant 0 : index
      %c0_25 = arith.constant 0 : index
      %c0_26 = arith.constant 0 : index
      %c0_27 = arith.constant 0 : index
      %35 = vector.load %arg5[%c0_24, %c0_25, %c0_26, %c0_27] : memref<1x1x8x128xf32, #tpu.memory_space<vmem>>, vector<1x1x8x128xf32>
      tpu.vector_store %arg5[%c0_24, %c0_25, %c0_26, %c0_27], %34 {strides = array<i32>} : memref<1x1x8x128xf32, #tpu.memory_space<vmem>>, vector<1x1x8x128xf32>,
      %cst_28 = arith.constant 0.000000e+00 : f32
      %36 = vector.broadcast %cst_28 : f32 to vector<1x1x8x128xf32>
      %c0_29 = arith.constant 0 : index
      %c0_30 = arith.constant 0 : index
      %c0_31 = arith.constant 0 : index
      %c0_32 = arith.constant 0 : index
      %37 = vector.load %arg6[%c0_29, %c0_30, %c0_31, %c0_32] : memref<1x1x8x128xf32, #tpu.memory_space<vmem>>, vector<1x1x8x128xf32>
      tpu.vector_store %arg6[%c0_29, %c0_30, %c0_31, %c0_32], %36 {strides = array<i32>} : memref<1x1x8x128xf32, #tpu.memory_space<vmem>>, vector<1x1x8x128xf32>,
    } else {
    }
    %cst = arith.constant 0.000000e+00 : f32
    %3 = vector.broadcast %cst : f32 to vector<8x128xf32>
    %c0_i32_1 = arith.constant 0 : i32
    %c8_i32 = arith.constant 8 : i32
    %4 = arith.muli %c0_i32_1, %c8_i32 : i32
    %5 = tpu.assume_multiple %4, 8 : i32
    %c0 = arith.constant 0 : index
    %6 = arith.index_cast %5 : i32 to index
    %c0_2 = arith.constant 0 : index
    %7 = vector.load %arg3[%c0, %6, %c0_2] : memref<1x8x128xf32, #tpu.memory_space<vmem>>, vector<1x8x128xf32>
    %8 = vector.shape_cast %7 : vector<1x8x128xf32> to vector<8x128xf32>
    %c0_3 = arith.constant 0 : index
    %9 = arith.index_cast %5 : i32 to index
    %c0_4 = arith.constant 0 : index
    %10 = vector.load %arg4[%c0_3, %9, %c0_4] : memref<1x8x128xf32, #tpu.memory_space<vmem>>, vector<1x8x128xf32>
    %11 = vector.shape_cast %10 : vector<1x8x128xf32> to vector<8x128xf32>
    %12 = arith.mulf %8, %11 : vector<8x128xf32>
    %13 = arith.mulf %8, %8 : vector<8x128xf32>
    %14 = arith.mulf %11, %11 : vector<8x128xf32>
    %15 = arith.addf %13, %14 : vector<8x128xf32>
    %16 = vector.shape_cast %12 : vector<8x128xf32> to vector<1x8x128xf32>
    %cst_5 = arith.constant dense<0.000000e+00> : vector<8x128xf32>
    %17 = vector.multi_reduction <add>, %16, %cst_5 [0] : vector<1x8x128xf32> to vector<8x128xf32>
    %18 = arith.addf %3, %17 : vector<8x128xf32>
    %19 = vector.shape_cast %15 : vector<8x128xf32> to vector<1x8x128xf32>
    %cst_6 = arith.constant dense<0.000000e+00> : vector<8x128xf32>
    %20 = vector.multi_reduction <add>, %19, %cst_6 [0] : vector<1x8x128xf32> to vector<8x128xf32>
    %21 = arith.addf %3, %20 : vector<8x128xf32>
    %c1_i32 = arith.constant 1 : i32
    %c0_7 = arith.constant 0 : index
    %c0_8 = arith.constant 0 : index
    %c0_9 = arith.constant 0 : index
    %c0_10 = arith.constant 0 : index
    %22 = vector.load %arg5[%c0_7, %c0_8, %c0_9, %c0_10] : memref<1x1x8x128xf32, #tpu.memory_space<vmem>>, vector<1x1x8x128xf32>
    %23 = vector.shape_cast %22 : vector<1x1x8x128xf32> to vector<8x128xf32>
    %24 = arith.addf %23, %18 : vector<8x128xf32>
    %c0_11 = arith.constant 0 : index
    %c0_12 = arith.constant 0 : index
    %c0_13 = arith.constant 0 : index
    %c0_14 = arith.constant 0 : index
    %25 = vector.load %arg5[%c0_11, %c0_12, %c0_13, %c0_14] : memref<1x1x8x128xf32, #tpu.memory_space<vmem>>, vector<1x1x8x128xf32>
    %26 = vector.shape_cast %25 : vector<1x1x8x128xf32> to vector<8x128xf32>
    %27 = vector.shape_cast %24 : vector<8x128xf32> to vector<1x1x8x128xf32>
    tpu.vector_store %arg5[%c0_11, %c0_12, %c0_13, %c0_14], %27 {strides = array<i32>} : memref<1x1x8x128xf32, #tpu.memory_space<vmem>>, vector<1x1x8x128xf32>,
    %c0_15 = arith.constant 0 : index
    %c0_16 = arith.constant 0 : index
    %c0_17 = arith.constant 0 : index
    %c0_18 = arith.constant 0 : index
    %28 = vector.load %arg6[%c0_15, %c0_16, %c0_17, %c0_18] : memref<1x1x8x128xf32, #tpu.memory_space<vmem>>, vector<1x1x8x128xf32>
    %29 = vector.shape_cast %28 : vector<1x1x8x128xf32> to vector<8x128xf32>
    %30 = arith.addf %29, %21 : vector<8x128xf32>
    %c0_19 = arith.constant 0 : index
    %c0_20 = arith.constant 0 : index
    %c0_21 = arith.constant 0 : index
    %c0_22 = arith.constant 0 : index
    %31 = vector.load %arg6[%c0_19, %c0_20, %c0_21, %c0_22] : memref<1x1x8x128xf32, #tpu.memory_space<vmem>>, vector<1x1x8x128xf32>
    %32 = vector.shape_cast %31 : vector<1x1x8x128xf32> to vector<8x128xf32>
    %33 = vector.shape_cast %30 : vector<8x128xf32> to vector<1x1x8x128xf32>
    tpu.vector_store %arg6[%c0_19, %c0_20, %c0_21, %c0_22], %33 {strides = array<i32>} : memref<1x1x8x128xf32, #tpu.memory_space<vmem>>, vector<1x1x8x128xf32>,
    return
  }
  func.func @transform_0(%arg0: i32, %arg1: i32, %arg2: i32) -> (i32, i32, i32) {
    %c1_i32 = arith.constant 1 : i32
    %0 = arith.muli %arg1, %c1_i32 : i32
    %1 = arith.addi %0, %arg2 : i32
    %c0_i32 = arith.constant 0 : i32
    %c0_i32_0 = arith.constant 0 : i32
    return %arg0, %1, %c0_i32 : i32, i32, i32
  }
  func.func @transform_1(%arg0: i32, %arg1: i32, %arg2: i32) -> (i32, i32, i32) {
    %c1_i32 = arith.constant 1 : i32
    %0 = arith.muli %arg1, %c1_i32 : i32
    %1 = arith.addi %0, %arg2 : i32
    %c0_i32 = arith.constant 0 : i32
    %c0_i32_0 = arith.constant 0 : i32
    return %arg0, %1, %c0_i32 : i32, i32, i32
  }
  func.func @transform_2(%arg0: i32, %arg1: i32, %arg2: i32) -> (i32, i32, i32, i32) {
    %c0_i32 = arith.constant 0 : i32
    %c0_i32_0 = arith.constant 0 : i32
    %c0_i32_1 = arith.constant 0 : i32
    return %arg0, %arg1, %c0_i32, %c0_i32_0 : i32, i32, i32, i32
  }
  func.func @transform_3(%arg0: i32, %arg1: i32, %arg2: i32) -> (i32, i32, i32, i32) {
    %c0_i32 = arith.constant 0 : i32
    %c0_i32_0 = arith.constant 0 : i32
    %c0_i32_1 = arith.constant 0 : i32
    return %arg0, %arg1, %c0_i32, %c0_i32_0 : i32, i32, i32, i32
  }
}

</mosaic_0001>

<llo_original>
// kernel: tpu_custom_call.1
$region0: #{tpu_custom_call.1}
  #allocation0 [shape = 'u32[]', space=smem, size = 0x4, offset = 0x4, fixed_abs, tag = 'smem constant byte address 0x4 - core index']
  #allocation1 [shape = 'u32[144,128]{1,0:T(1,128)}', space=vmem, size = 0x12000, scoped, tag = 'internal scratch']
  %s0 = inlined_call_operand.hbm [shape: f32[2,8,128], index: 0, kind: input, shape index: {}]
  %s1 = inlined_call_operand.hbm [shape: f32[2,8,128], index: 1, kind: input, shape index: {}]
  %s2 = inlined_call_operand.hbm [shape: f32[2,1,8,128], index: 2, kind: output, shape index: {0}]
  %s3 = inlined_call_operand.hbm [shape: f32[2,1,8,128], index: 3, kind: output, shape index: {1}]
  %4 = xla_tuple %s2, %s3
  %s5 = sld [smem:[#allocation0]]
  $region61: #{tpu_custom_call.1} parent=0
    _
  %s7 = ssub.s32 1, %s5
  %s8 = scalar_select 0, %s7, %s5
  $region1: #{tpu_custom_call.1} parent=0
    #allocation2 [shape = 'u8[8192]{0}', space=vmem, size = 0x2000, scoped, tag = 'input window, operand 0']
    #allocation3 [shape = 's32[2]{0}', space=sflag, size = 0x8, scoped, tag = 'scoped memory for tpu_custom_call.1']
    #allocation4 [shape = 's32[2]{0}', space=sflag, size = 0x8, scoped, tag = 'scoped memory for tpu_custom_call.1']
    #allocation5 [shape = 'u8[8192]{0}', space=vmem, size = 0x2000, scoped, tag = 'input window, operand 1']
    #allocation6 [shape = 's32[2]{0}', space=sflag, size = 0x8, scoped, tag = 'scoped memory for tpu_custom_call.1']
    #allocation7 [shape = 'u8[8192]{0}', space=vmem, size = 0x2000, scoped, tag = 'output window, operand 0']
    #allocation8 [shape = 'u8[8192]{0}', space=vmem, size = 0x2000, scoped, tag = 'output window, operand 1']
    #allocation9 [shape = 's32[2]{0}', space=sflag, size = 0x8, scoped, tag = 'scoped memory for tpu_custom_call.1']
    %9 = vsyncpa [#allocation3], 0
    %s10 = scalar_lea.sflag [#allocation3], 1
    %11 = vsyncpa %s10, 0
    %12 = vsyncpa [#allocation6], 0
    %s13 = scalar_lea.sflag [#allocation6], 1
    %14 = vsyncpa %s13, 0
    %15 = vsyncpa [#allocation4], 0
    %s16 = scalar_lea.sflag [#allocation4], 1
    %17 = vsyncpa %s16, 0
    %18 = vsyncpa [#allocation9], 0
    %s19 = scalar_lea.sflag [#allocation9], 1
    %20 = vsyncpa %s19, 0
    loop: start=0, step=1, limit=4
    $region2: #{tpu_custom_call.1} parent=1 // loop_pre_header
      _
    $region3: #{tpu_custom_call.1} parent=1 // loop_header
      %s22 = sphi 0, %s26
      %p23 = scmp.ge.s32.totalorder %s22, 4
      %s29 = sphi 0, %s48
      %s30 = sphi 0, %s44
      %s31 = sphi 0, %s40
      %s32 = sphi 0, %s29
      %s33 = sphi 0, %s30
      %s34 = sphi 0, %s31
      %s35 = sphi 0, %s32
      %s36 = sphi 0, %s33
      %s37 = sphi 0, %s34
      %s55 = sphi 0, %s57
      %s58 = sphi 0, %s55
      %s59 = sphi 0, %s58
      %s75 = sphi 0, %s59
      %s85 = sphi 0, %s87
      %s88 = sphi 0, %s85
      %s89 = sphi 0, %s88
      %s105 = sphi 0, %s89
      %s113 = sphi 0, %s115
      %s116 = sphi 0, %s113
      %s117 = sphi 0, %s116
      %s133 = sphi 0, %s117
      %s141 = sphi 0, %s143
      %s144 = sphi 0, %s141
      %s145 = sphi 0, %s144
      %s161 = sphi 0, %s145
    $region4: #{tpu_custom_call.1} parent=1 // loop_header_branch
      %25 = sbr.rel (%p23) target = $region8
    $region5: #{tpu_custom_call.1} parent=1 // loop_body
      %s27 = ssub.s32 %s22, 1
      %s28 = ssub.s32 %s22, 2
      %s38 = sadd.s32 1, %s31
      %p39 = scmp.ge.s32.totalorder %s38, 1
      %s40 = scalar_select %p39, 0, %s38
      %s41 = sadd.s32 1, %s30
      %s42 = scalar_select %p39, %s41, %s30
      %p43 = scmp.ge.s32.totalorder %s42, 1
      %s44 = scalar_select %p43, 0, %s42
      %s45 = sadd.s32 1, %s29
      %s46 = scalar_select %p43, %s45, %s29
      %p47 = scmp.ge.s32.totalorder %s46, 2
      %s48 = scalar_select %p47, 0, %s46
      %s49 = sadd.s32 %s30, %s31
      %s50 = sadd.s32 %s44, %s40
      %s51 = ssub.s32 %s29, %s48
      %s52 = ssub.s32 %s49, %s50
      %s53 = sor.u32 %s51, %s52
      %p54 = scmp.eq.s32.totalorder %s53, 0
      %s56 = sadd.s32 %s55, 1
      %s57 = scalar_select %p54, %s55, %s56
      %p60 = pneg %p54
      %p61 = scmp.eq.s32.totalorder %s22, 1
      %p62 = por %p60, %p61
      %p63 = scmp.ne.s32.totalorder %s55, %s58
      %p64 = scmp.eq.s32.totalorder %s22, 0
      %p65 = por %p63, %p64
      %p66 = scmp.ne.s32.totalorder %s55, %s58
      %p67 = scmp.eq.s32.totalorder %s27, 1
      %p68 = por %p66, %p67
      %p69 = scmp.ne.s32.totalorder %s58, %s59
      %p70 = scmp.eq.s32.totalorder %s27, 0
      %p71 = por %p69, %p70
      %p72 = scmp.ne.s32.totalorder %s58, %s59
      %p73 = scmp.eq.s32.totalorder %s28, 1
      %p74 = por %p72, %p73
      %p76 = scmp.ne.s32.totalorder %s59, %s75
      %p77 = scmp.eq.s32.totalorder %s28, 0
      %p78 = por %p76, %p77
      %s79 = sadd.s32 %s30, %s31
      %s80 = sadd.s32 %s44, %s40
      %s81 = ssub.s32 %s29, %s48
      %s82 = ssub.s32 %s79, %s80
      %s83 = sor.u32 %s81, %s82
      %p84 = scmp.eq.s32.totalorder %s83, 0
      %s86 = sadd.s32 %s85, 1
      %s87 = scalar_select %p84, %s85, %s86
      %p90 = pneg %p84
      %p91 = scmp.eq.s32.totalorder %s22, 1
      %p92 = por %p90, %p91
      %p93 = scmp.ne.s32.totalorder %s85, %s88
      %p94 = scmp.eq.s32.totalorder %s22, 0
      %p95 = por %p93, %p94
      %p96 = scmp.ne.s32.totalorder %s85, %s88
      %p97 = scmp.eq.s32.totalorder %s27, 1
      %p98 = por %p96, %p97
      %p99 = scmp.ne.s32.totalorder %s88, %s89
      %p100 = scmp.eq.s32.totalorder %s27, 0
      %p101 = por %p99, %p100
      %p102 = scmp.ne.s32.totalorder %s88, %s89
      %p103 = scmp.eq.s32.totalorder %s28, 1
      %p104 = por %p102, %p103
      %p106 = scmp.ne.s32.totalorder %s89, %s105
      %p107 = scmp.eq.s32.totalorder %s28, 0
      %p108 = por %p106, %p107
      %s109 = ssub.s32 %s29, %s48
      %s110 = ssub.s32 %s30, %s44
      %s111 = sor.u32 %s109, %s110
      %p112 = scmp.eq.s32.totalorder %s111, 0
      %s114 = sadd.s32 %s113, 1
      %s115 = scalar_select %p112, %s113, %s114
      %p118 = pneg %p112
      %p119 = scmp.eq.s32.totalorder %s22, 1
      %p120 = por %p118, %p119
      %p121 = scmp.ne.s32.totalorder %s113, %s116
      %p122 = scmp.eq.s32.totalorder %s22, 0
      %p123 = por %p121, %p122
      %p124 = scmp.ne.s32.totalorder %s113, %s116
      %p125 = scmp.eq.s32.totalorder %s27, 1
      %p126 = por %p124, %p125
      %p127 = scmp.ne.s32.totalorder %s116, %s117
      %p128 = scmp.eq.s32.totalorder %s27, 0
      %p129 = por %p127, %p128
      %p130 = scmp.ne.s32.totalorder %s116, %s117
      %p131 = scmp.eq.s32.totalorder %s28, 1
      %p132 = por %p130, %p131
      %p134 = scmp.ne.s32.totalorder %s117, %s133
      %p135 = scmp.eq.s32.totalorder %s28, 0
      %p136 = por %p134, %p135
      %s137 = ssub.s32 %s29, %s48
      %s138 = ssub.s32 %s30, %s44
      %s139 = sor.u32 %s137, %s138
      %p140 = scmp.eq.s32.totalorder %s139, 0
      %s142 = sadd.s32 %s141, 1
      %s143 = scalar_select %p140, %s141, %s142
      %p146 = pneg %p140
      %p147 = scmp.eq.s32.totalorder %s22, 1
      %p148 = por %p146, %p147
      %p149 = scmp.ne.s32.totalorder %s141, %s144
      %p150 = scmp.eq.s32.totalorder %s22, 0
      %p151 = por %p149, %p150
      %p152 = scmp.ne.s32.totalorder %s141, %s144
      %p153 = scmp.eq.s32.totalorder %s27, 1
      %p154 = por %p152, %p153
      %p155 = scmp.ne.s32.totalorder %s144, %s145
      %p156 = scmp.eq.s32.totalorder %s27, 0
      %p157 = por %p155, %p156
      %p158 = scmp.ne.s32.totalorder %s144, %s145
      %p159 = scmp.eq.s32.totalorder %s28, 1
      %p160 = por %p158, %p159
      %p162 = scmp.ne.s32.totalorder %s145, %s161
      %p163 = scmp.eq.s32.totalorder %s28, 0
      %p164 = por %p162, %p163
      %p165 = scmp.le.s32.totalorder 1, %s22
      %p166 = scmp.lt.s32.totalorder %s22, 3
      %p167 = pnand %p165, %p166
      %p168 = pneg %p167
      // Predicated region
      $region9: #{tpu_custom_call.1} parent=5 // pred_check
        _
      $region10: #{tpu_custom_call.1} parent=5 // pred_check_branch
        %170 = sbr.rel (%p167) target = $region12
      $region11: #{tpu_custom_call.1} parent=5 // pred_region
        %s171 = ssub.s32 %s22, 1
      $region12: #{tpu_custom_call.1} parent=5 // pred_fallthru
        _
      %p172 = scmp.lt.s32.totalorder %s22, 2
      // Predicated region
      $region13: #{tpu_custom_call.1} parent=5 // pred_check
        %p173 = pneg %p172
      $region14: #{tpu_custom_call.1} parent=5 // pred_check_branch
        %175 = sbr.rel (%p173) target = $region16
      $region15: #{tpu_custom_call.1} parent=5 // pred_region
        // Predicated region
        $region17: #{tpu_custom_call.1} parent=15 // pred_check
          %p176 = pneg %p65
        $region18: #{tpu_custom_call.1} parent=15 // pred_check_branch
          %178 = sbr.rel (%p176) target = $region20
        $region19: #{tpu_custom_call.1} parent=15 // pred_region
          %s179 = sand.u32 %s55, 1
          %s180 = scalar_lea.sflag [#allocation3], %s179
          %s181 = sand.u32 %s55, 1
          %s182 = smul.addr %s181, 8
          %s183 = scalar_lea.vmem [#allocation2], %s182
          %s184 = sadd.s32 %s30, %s31
          %s186 = ssub.s32 128, 128
          %187 = vsyncadd %s180, %s186
          %s188 = sadd.s32 %s184, %s29
          %s189 = smul.addr %s188, 128
          %s190 = scalar_lea.hbm %s0, %s189
          %s192 = sshll.u32 %s183, 4
          %s193 = int_to_ptr.vmem [resolvable:$true] %s192
          %195 = dma.hbm_to_vmem [thread:$0]  %s190, 128, %s193, %s180
        $region20: #{tpu_custom_call.1} parent=15 // pred_fallthru
          _
        // Predicated region
        $region21: #{tpu_custom_call.1} parent=15 // pred_check
          %p196 = pneg %p95
        $region22: #{tpu_custom_call.1} parent=15 // pred_check_branch
          %198 = sbr.rel (%p196) target = $region24
        $region23: #{tpu_custom_call.1} parent=15 // pred_region
          %s199 = sand.u32 %s85, 1
          %s200 = scalar_lea.sflag [#allocation6], %s199
          %s201 = sand.u32 %s85, 1
          %s202 = smul.addr %s201, 8
          %s203 = scalar_lea.vmem [#allocation5], %s202
          %s204 = sadd.s32 %s30, %s31
          %s206 = ssub.s32 128, 128
          %207 = vsyncadd %s200, %s206
          %s208 = sadd.s32 %s204, %s29
          %s209 = smul.addr %s208, 128
          %s210 = scalar_lea.hbm %s1, %s209
          %s212 = sshll.u32 %s203, 4
          %s213 = int_to_ptr.vmem [resolvable:$true] %s212
          %215 = dma.hbm_to_vmem [thread:$0]  %s210, 128, %s213, %s200
        $region24: #{tpu_custom_call.1} parent=15 // pred_fallthru
          _
      $region16: #{tpu_custom_call.1} parent=5 // pred_fallthru
        _
      %p216 = scmp.le.s32.totalorder 1, %s22
      %p217 = scmp.lt.s32.totalorder %s22, 3
      %p218 = pnand %p216, %p217
      %p219 = pneg %p218
      // Predicated region
      $region25: #{tpu_custom_call.1} parent=5 // pred_check
        _
      $region26: #{tpu_custom_call.1} parent=5 // pred_check_branch
        %221 = sbr.rel (%p218) target = $region28
      $region27: #{tpu_custom_call.1} parent=5 // pred_region
        %s222 = ssub.s32 %s22, 1
        %s223 = sand.u32 %s58, 1
        %s224 = scalar_lea.sflag [#allocation3], %s223
        %s225 = sand.u32 %s58, 1
        %s226 = smul.addr %s225, 8
        %s227 = scalar_lea.vmem [#allocation2], %s226
        // Predicated region
        $region29: #{tpu_custom_call.1} parent=27 // pred_check
          %p228 = pneg %p71
        $region30: #{tpu_custom_call.1} parent=27 // pred_check_branch
          %230 = sbr.rel (%p228) target = $region32
        $region31: #{tpu_custom_call.1} parent=27 // pred_region
          %231 = dma.done %s224, 128
        $region32: #{tpu_custom_call.1} parent=27 // pred_fallthru
          _
        %s232 = sand.u32 %s88, 1
        %s233 = scalar_lea.sflag [#allocation6], %s232
        %s234 = sand.u32 %s88, 1
        %s235 = smul.addr %s234, 8
        %s236 = scalar_lea.vmem [#allocation5], %s235
        // Predicated region
        $region33: #{tpu_custom_call.1} parent=27 // pred_check
          %p237 = pneg %p101
        $region34: #{tpu_custom_call.1} parent=27 // pred_check_branch
          %239 = sbr.rel (%p237) target = $region36
        $region35: #{tpu_custom_call.1} parent=27 // pred_region
          %240 = dma.done %s233, 128
        $region36: #{tpu_custom_call.1} parent=27 // pred_fallthru
          _
        %s241 = sand.u32 %s58, 1
        %s242 = scalar_lea.sflag [#allocation3], %s241
        %s243 = sand.u32 %s58, 1
        %s244 = smul.addr %s243, 8
        %s245 = scalar_lea.vmem [#allocation2], %s244
        %p246 = pneg %p71
        %p247 = pneg %p68
        %s248 = sand.u32 %s88, 1
        %s249 = scalar_lea.sflag [#allocation6], %s248
        %s250 = sand.u32 %s88, 1
        %s251 = smul.addr %s250, 8
        %s252 = scalar_lea.vmem [#allocation5], %s251
        %p253 = pneg %p101
        %p254 = pneg %p98
        %p255 = pneg %p129
        %p256 = pneg %p126
        %s257 = sand.u32 %s116, 1
        %s258 = scalar_lea.sflag [#allocation4], %s257
        %s259 = sand.u32 %s116, 1
        %s260 = smul.addr %s259, 8
        %s261 = scalar_lea.vmem [#allocation7], %s260
        %p262 = pneg %p157
        %p263 = pneg %p154
        %s264 = sand.u32 %s144, 1
        %s265 = scalar_lea.sflag [#allocation9], %s264
        %s266 = sand.u32 %s144, 1
        %s267 = smul.addr %s266, 8
        %s268 = scalar_lea.vmem [#allocation8], %s267
        %s269 = sadd.s32 %s33, %s34
        %s270 = sadd.s32 %s33, %s34
        %p271 = scmp.eq.s32.totalorder %s34, 0
        // Predicated region
        $region37: #{tpu_custom_call.1} parent=27 // pred_check
          %p272 = pneg %p271
        $region38: #{tpu_custom_call.1} parent=27 // pred_check_branch
          %274 = sbr.rel (%p272) target = $region40
        $region39: #{tpu_custom_call.1} parent=27 // pred_region
          %275 = vst [vmem:[%s261] sm:$0xff] 0.0
          %276 = vst [vmem:[%s268] sm:$0xff] 0.0
        $region40: #{tpu_custom_call.1} parent=27 // pred_fallthru
          _
        %v277 = vld [vmem:[%s227] sm:$0xff]
        %v278 = vld [vmem:[%s236] sm:$0xff]
        %v279 = vmul.f32 %v277, %v278
        %v280 = vmul.f32 %v277, %v277
        %v281 = vmul.f32 %v278, %v278
        %v282 = vadd.f32 %v280, %v281
        %v283 = vadd.f32 %v279, 0.0
        %v284 = vadd.f32 %v283, 0.0
        %v285 = vadd.f32 %v282, 0.0
        %v286 = vadd.f32 %v285, 0.0
        %v287 = vld [vmem:[%s261] sm:$0xff]
        %v288 = vadd.f32 %v287, %v284
        %289 = vst [vmem:[%s261] sm:$0xff] %v288
        %v290 = vld [vmem:[%s268] sm:$0xff]
        %v291 = vadd.f32 %v290, %v286
        %292 = vst [vmem:[%s268] sm:$0xff] %v291
        %s293 = sand.u32 %s116, 1
        %s294 = scalar_lea.sflag [#allocation4], %s293
        %s295 = sand.u32 %s116, 1
        %s296 = smul.addr %s295, 8
        %s297 = scalar_lea.vmem [#allocation7], %s296
        %s298 = sand.u32 %s144, 1
        %s299 = scalar_lea.sflag [#allocation9], %s298
        %s300 = sand.u32 %s144, 1
        %s301 = smul.addr %s300, 8
        %s302 = scalar_lea.vmem [#allocation8], %s301
        // Predicated region
        $region41: #{tpu_custom_call.1} parent=27 // pred_check
          %p303 = pneg %p126
        $region42: #{tpu_custom_call.1} parent=27 // pred_check_branch
          %305 = sbr.rel (%p303) target = $region44
        $region43: #{tpu_custom_call.1} parent=27 // pred_region
          %s307 = ssub.s32 128, 128
          %308 = vsyncadd %s294, %s307
          %s309 = sadd.s32 %s33, %s32
          %s310 = smul.addr %s309, 128
          %s311 = scalar_lea.hbm %s2, %s310
          %s313 = sshll.u32 %s297, 4
          %s314 = int_to_ptr.vmem [resolvable:$true] %s313
          %316 = dma.vmem_to_hbm [thread:$0]  %s314, 128, %s311, %s294
        $region44: #{tpu_custom_call.1} parent=27 // pred_fallthru
          _
        // Predicated region
        $region45: #{tpu_custom_call.1} parent=27 // pred_check
          %p317 = pneg %p154
        $region46: #{tpu_custom_call.1} parent=27 // pred_check_branch
          %319 = sbr.rel (%p317) target = $region48
        $region47: #{tpu_custom_call.1} parent=27 // pred_region
          %s321 = ssub.s32 128, 128
          %322 = vsyncadd %s299, %s321
          %s323 = sadd.s32 %s33, %s32
          %s324 = smul.addr %s323, 128
          %s325 = scalar_lea.hbm %s3, %s324
          %s327 = sshll.u32 %s302, 4
          %s328 = int_to_ptr.vmem [resolvable:$true] %s327
          %330 = dma.vmem_to_hbm [thread:$0]  %s328, 128, %s325, %s299
        $region48: #{tpu_custom_call.1} parent=27 // pred_fallthru
          _
      $region28: #{tpu_custom_call.1} parent=5 // pred_fallthru
        _
      %p331 = scmp.le.s32.totalorder 2, %s22
      // Predicated region
      $region49: #{tpu_custom_call.1} parent=5 // pred_check
        %p332 = pneg %p331
      $region50: #{tpu_custom_call.1} parent=5 // pred_check_branch
        %334 = sbr.rel (%p332) target = $region52
      $region51: #{tpu_custom_call.1} parent=5 // pred_region
        %s335 = ssub.s32 %s22, 2
        // Predicated region
        $region53: #{tpu_custom_call.1} parent=51 // pred_check
          %p336 = pneg %p132
        $region54: #{tpu_custom_call.1} parent=51 // pred_check_branch
          %338 = sbr.rel (%p336) target = $region56
        $region55: #{tpu_custom_call.1} parent=51 // pred_region
          %s339 = sand.u32 %s117, 1
          %s340 = scalar_lea.sflag [#allocation4], %s339
          %s341 = sand.u32 %s117, 1
          %s342 = smul.addr %s341, 8
          %s343 = scalar_lea.vmem [#allocation7], %s342
          %344 = dma.done %s340, 128
        $region56: #{tpu_custom_call.1} parent=51 // pred_fallthru
          _
        // Predicated region
        $region57: #{tpu_custom_call.1} parent=51 // pred_check
          %p345 = pneg %p160
        $region58: #{tpu_custom_call.1} parent=51 // pred_check_branch
          %347 = sbr.rel (%p345) target = $region60
        $region59: #{tpu_custom_call.1} parent=51 // pred_region
          %s348 = sand.u32 %s145, 1
          %s349 = scalar_lea.sflag [#allocation9], %s348
          %s350 = sand.u32 %s145, 1
          %s351 = smul.addr %s350, 8
          %s352 = scalar_lea.vmem [#allocation8], %s351
          %353 = dma.done %s349, 128
        $region60: #{tpu_custom_call.1} parent=51 // pred_fallthru
          _
      $region52: #{tpu_custom_call.1} parent=5 // pred_fallthru
        _
    $region6: #{tpu_custom_call.1} parent=1 // loop_footer
      %s26 = sadd.s32 1, %s22
    $region7: #{tpu_custom_call.1} parent=1 // loop_footer_branch
      %21 = sbr.rel target = $region3
    $region8: #{tpu_custom_call.1} parent=1 // loop_exit
      _
    %354 = vsyncpa [#allocation3], 1
    %s355 = scalar_lea.sflag [#allocation3], 1
    %356 = vsyncpa %s355, 1
    %357 = vsyncpa [#allocation6], 1
    %s358 = scalar_lea.sflag [#allocation6], 1
    %359 = vsyncpa %s358, 1
    %360 = vsyncpa [#allocation4], 1
    %s361 = scalar_lea.sflag [#allocation4], 1
    %362 = vsyncpa %s361, 1
    %363 = vsyncpa [#allocation9], 1
    %s364 = scalar_lea.sflag [#allocation9], 1
    %365 = vsyncpa %s364, 1

</llo_original>
